<compile_context>
chip_gen: v5e
topology: v5e:2x2
jax: 0.10.0
libtpu: 0.0.40
codegen_flags: <defaults>
</compile_context>

<pallas_src>
import inspect

import jax
import jax.numpy as jnp
from jax import lax
from jax.experimental import pallas as pl
from jax.experimental.pallas import tpu as pltpu


_FORI_HAS_UNROLL = "unroll" in inspect.signature(lax.fori_loop).parameters


# ------------------------------- small helpers -------------------------------
def _ceil_to(x: int, m: int) -> int:
    return ((x + m - 1) // m) * m


def _largest_divisor_leq(n: int, cap: int) -> int:
    cap = max(1, min(n, cap))
    for d in range(cap, 0, -1):
        if n % d == 0:
            return d
    return 1


def _pick_time_tile(T: int, cap: int) -> int:
    """Largest divisor of T that is a multiple of 8 and <= cap, else full T."""
    best = None
    for d in range(1, min(T, cap) + 1):
        if T % d == 0 and d % 8 == 0:
            best = d
    return best if best is not None else T


def _device_kind() -> str:
    try:
        return jax.devices()[0].device_kind.lower()
    except Exception:
        return ""


def _is_dual_tensorcore() -> bool:
    # v7x exposes 2 TensorCores; "parallel" grid axes are sharded across them.
    kind = _device_kind()
    return ("v7" in kind) or ("7x" in kind)


def _lstm_vmem_budgets():
    """(chunk_budget_bytes, vmem_limit_bytes) for the LSTM recurrence kernel."""
    if _is_dual_tensorcore():                    # v7x: 64 MiB physical VMEM
        return 16 * 1024 * 1024, 48 * 1024 * 1024
    return 28 * 1024 * 1024, 96 * 1024 * 1024    # v5e / v6e: 128 MiB physical


# --------------------------- tiled matmul + bias ------------------------------
def _matmul_bias_kernel_1k(x_ref, w_ref, b_ref, o_ref):
    # Single K tile: no accumulator scratch, write dot + bias straight out.
    o_ref[...] = (jnp.dot(x_ref[...], w_ref[...],
                          preferred_element_type=jnp.float32)
                  + b_ref[...]).astype(o_ref.dtype)


def _matmul_bias_kernel_mk(x_ref, w_ref, b_ref, o_ref, acc_ref):
    k = pl.program_id(2)

    @pl.when(k == 0)
    def _():
        acc_ref[...] = jnp.zeros_like(acc_ref)

    acc_ref[...] += jnp.dot(x_ref[...], w_ref[...],
                            preferred_element_type=jnp.float32)

    @pl.when(k == pl.num_programs(2) - 1)
    def _():
        o_ref[...] = (acc_ref[...] + b_ref[...]).astype(o_ref.dtype)


def matmul_bias(x, w, b, *, out_dtype=jnp.bfloat16):
    """(M,K)bf16 @ (K,N)bf16 + b(1,N)f32 -> (M,N) out_dtype.

    Requires M % 8 == 0 and N % 128 == 0.  K is either used whole as a single
    K tile (K <= 512, no padding) or must be a multiple of 128 (pre-padded by
    the caller at init time)."""
    M, K = x.shape
    N = w.shape[1]
    assert M % 8 == 0 and N % 128 == 0
    tm = 8 * _largest_divisor_leq(M // 8, 64)       # <= 512, divides M
    tn = 128 * _largest_divisor_leq(N // 128, 4)    # <= 512, divides N

    if K <= 512:
        grid = (M // tm, N // tn)
        return pl.pallas_call(
            _matmul_bias_kernel_1k,
            out_shape=jax.ShapeDtypeStruct((M, N), out_dtype),
            grid_spec=pltpu.PrefetchScalarGridSpec(
                num_scalar_prefetch=0,
                grid=grid,
                in_specs=[
                    pl.BlockSpec((tm, K), lambda i, j: (i, 0)),
                    pl.BlockSpec((K, tn), lambda i, j: (0, j)),
                    pl.BlockSpec((1, tn), lambda i, j: (0, j)),
                ],
                out_specs=pl.BlockSpec((tm, tn), lambda i, j: (i, j)),
            ),
            compiler_params=pltpu.CompilerParams(
                dimension_semantics=("parallel", "parallel")),
            cost_estimate=pl.CostEstimate(
                flops=2 * M * N * K, transcendentals=0,
                bytes_accessed=M * K * 2 + K * N * 2 + M * N * 2),
        )(x, w, b)

    assert K % 128 == 0
    tk = 128 * _largest_divisor_leq(K // 128, 4)
    grid = (M // tm, N // tn, K // tk)
    return pl.pallas_call(
        _matmul_bias_kernel_mk,
        out_shape=jax.ShapeDtypeStruct((M, N), out_dtype),
        grid_spec=pltpu.PrefetchScalarGridSpec(
            num_scalar_prefetch=0,
            grid=grid,
            in_specs=[
                pl.BlockSpec((tm, tk), lambda i, j, k: (i, k)),
                pl.BlockSpec((tk, tn), lambda i, j, k: (k, j)),
                pl.BlockSpec((1, tn), lambda i, j, k: (0, j)),
            ],
            out_specs=pl.BlockSpec((tm, tn), lambda i, j, k: (i, j)),
            scratch_shapes=[pltpu.VMEM((tm, tn), jnp.float32)],
        ),
        compiler_params=pltpu.CompilerParams(
            dimension_semantics=("parallel", "parallel", "arbitrary")),
        cost_estimate=pl.CostEstimate(
            flops=2 * M * N * K, transcendentals=0,
            bytes_accessed=M * K * 2 + K * N * 2 + M * N * 2),
    )(x, w, b)


# ------------------------------ LSTM recurrence -------------------------------
def _lstm_kernel(gin_ref, whh_ref, out_ref, hN_ref, cN_ref, h_sc, c_sc):
    tc = pl.program_id(1)
    t_chunk = gin_ref.shape[0]          # static
    Hp = h_sc.shape[-1]                 # static, multiple of 128

    @pl.when(tc == 0)
    def _():
        h_sc[...] = jnp.zeros_like(h_sc)
        c_sc[...] = jnp.zeros_like(c_sc)

    def step(t, carry):
        # gates_in already holds x_t @ W_ih + (b_ih + b_hh) in bf16; per step
        # only the small recurrent matmul hits the MXU (bf16 ops, f32 acc).
        gates = gin_ref[t].astype(jnp.float32) + jnp.dot(
            h_sc[...].astype(jnp.bfloat16), whh_ref[...],
            preferred_element_type=jnp.float32)
        # TODO(synk): on v6e/v7x the sigmoid/tanh could run in bf16 on the EUP.
        i = jax.nn.sigmoid(gates[:, 0 * Hp:1 * Hp])   # lane-aligned slices
        f = jax.nn.sigmoid(gates[:, 1 * Hp:2 * Hp])
        g = jnp.tanh(gates[:, 2 * Hp:3 * Hp])
        o = jax.nn.sigmoid(gates[:, 3 * Hp:4 * Hp])
        c = f * c_sc[...] + i * g
        h = o * jnp.tanh(c)
        h_sc[...] = h
        c_sc[...] = c
        out_ref[t] = h.astype(out_ref.dtype)          # dense (tb, Hp) bf16 store
        return carry

    if _FORI_HAS_UNROLL:
        unroll = t_chunk if t_chunk <= 16 else 8
        lax.fori_loop(0, t_chunk, step, 0, unroll=unroll)
    else:
        lax.fori_loop(0, t_chunk, step, 0)

    @pl.when(tc == pl.num_programs(1) - 1)
    def _():
        hN_ref[...] = h_sc[...]
        cN_ref[...] = c_sc[...]


def run_lstm(gates_in, w_hh, tb):
    """gates_in: (T, Bp, 4Hp) bf16 (precomputed input projection + bias).
    w_hh: (Hp, 4Hp) bf16.  tb: batch tile (multiple of 8, divides Bp).
    Returns (outputs (T, Bp, Hp) bf16, h_n (Bp, Hp) f32, c_n (Bp, Hp) f32)."""
    T, Bp, G = gates_in.shape
    Hp = G // 4
    assert Bp % tb == 0 and tb % 8 == 0

    chunk_budget, vmem_limit = _lstm_vmem_budgets()

    def _fixed_bytes(tbv):
        # W_hh double-buffered + h/c scratch + hN/cN output buffers (x2).
        return 2 * Hp * G * 2 + 2 * tbv * Hp * 4 + 2 * 2 * tbv * Hp * 4

    def _per_t_bytes(tbv):
        # double-buffered bf16 gates_in block + bf16 out block, per timestep.
        return 2 * tbv * (G + Hp) * 2

    # Shrink the batch tile only if even a single-timestep chunk won't fit.
    while tb > 8 and (tb // 2) % 8 == 0 and \
            _fixed_bytes(tb) + _per_t_bytes(tb) > chunk_budget:
        tb //= 2

    cap = max(1, (chunk_budget - _fixed_bytes(tb)) // max(1, _per_t_bytes(tb)))
    t_chunk = _largest_divisor_leq(T, min(256, cap))
    grid = (Bp // tb, T // t_chunk)

    return pl.pallas_call(
        _lstm_kernel,
        out_shape=(jax.ShapeDtypeStruct((T, Bp, Hp), jnp.bfloat16),
                   jax.ShapeDtypeStruct((Bp, Hp), jnp.float32),
                   jax.ShapeDtypeStruct((Bp, Hp), jnp.float32)),
        grid_spec=pltpu.PrefetchScalarGridSpec(
            num_scalar_prefetch=0,
            grid=grid,
            in_specs=[
                pl.BlockSpec((t_chunk, tb, G), lambda b, t: (t, b, 0)),
                # TODO(synk): single-buffer this constant weight block
                # (pl.Buffered(1)) on v7x to save VMEM once the API settles.
                pl.BlockSpec((Hp, G), lambda b, t: (0, 0)),
            ],
            out_specs=[
                pl.BlockSpec((t_chunk, tb, Hp), lambda b, t: (t, b, 0)),
                pl.BlockSpec((tb, Hp), lambda b, t: (b, 0)),
                pl.BlockSpec((tb, Hp), lambda b, t: (b, 0)),
            ],
            scratch_shapes=[pltpu.VMEM((tb, Hp), jnp.float32),
                            pltpu.VMEM((tb, Hp), jnp.float32)],
        ),
        compiler_params=pltpu.CompilerParams(
            # batch tiles are independent (sharded across the 2 TCs on v7x);
            # the time axis carries the recurrence.
            dimension_semantics=("parallel", "arbitrary"),
            vmem_limit_bytes=vmem_limit),
        cost_estimate=pl.CostEstimate(
            flops=2 * T * Bp * Hp * G + 10 * T * Bp * G,
            transcendentals=5 * T * Bp * Hp,
            bytes_accessed=T * Bp * (G + Hp) * 2 + Hp * G * 2 + 2 * Bp * Hp * 4),
    )(gates_in, w_hh)


# ----------------------------- output projection ------------------------------
def _fc_kernel(y_ref, w_ref, b_ref, o_ref):
    o_ref[...] = (jnp.dot(y_ref[...], w_ref[...],
                          preferred_element_type=jnp.float32)
                  + b_ref[...]).astype(o_ref.dtype)


def run_fc(y2d, Bp, w_fc, b_fc):
    """y2d: (T, Bp*Hp) bf16 (time-major LSTM output, free reshape),
    w_fc: (Hp, Vp) bf16, b_fc: (1, Vp) f32.
    Returns logits (Bp, T, Vp) f32 whose flat view is batch-major (b*T + t)."""
    T = y2d.shape[0]
    Hp, Vp = w_fc.shape
    assert y2d.shape[1] == Bp * Hp
    tn = 128 * _largest_divisor_leq(Vp // 128, 4)   # <= 512, divides Vp
    tt = _pick_time_tile(T, 256)                    # %8 divisor of T, else T
    n_tt = T // tt
    grid = (Vp // tn, Bp, n_tt)  # vocab tile outermost -> weight tile reused.

    return pl.pallas_call(
        _fc_kernel,
        out_shape=jax.ShapeDtypeStruct((Bp, T, Vp), jnp.float32),
        grid_spec=pltpu.PrefetchScalarGridSpec(
            num_scalar_prefetch=0,
            grid=grid,
            in_specs=[
                # (tt, Hp) block of the time-major activation; the column
                # block index selects the batch row (Hp is lane-aligned), so
                # no XLA transpose is needed in front of the FC.
                pl.BlockSpec((tt, Hp), lambda v, b, t: (t, b)),
                pl.BlockSpec((Hp, tn), lambda v, b, t: (0, v)),
                pl.BlockSpec((1, tn), lambda v, b, t: (0, v)),
            ],
            # Rows land directly in PyTorch's output.view(-1, H) order.
            out_specs=pl.BlockSpec((None, tt, tn), lambda v, b, t: (b, t, v)),
        ),
        compiler_params=pltpu.CompilerParams(
            dimension_semantics=("parallel", "parallel", "parallel")),
        cost_estimate=pl.CostEstimate(
            flops=2 * Bp * T * Hp * Vp, transcendentals=0,
            bytes_accessed=(Vp // tn) * T * Bp * Hp * 2 + Hp * Vp * 2
                           + Bp * T * Vp * 4),
    )(y2d, w_fc, b_fc)


# -------------------------------- WordRNN model -------------------------------
class WordRNNPallas:
    """Pallas-TPU forward of the PyTorch WordRNN (Embedding -> LSTM -> Linear)."""

    def __init__(self, vocab_size, embed_size, hidden_size, num_layers=1,
                 key=jax.random.PRNGKey(0)):
        assert num_layers == 1  # TODO(synk): stacked (num_layers > 1) LSTM not implemented
        self.vocab_size = vocab_size
        self.embed_size = embed_size
        self.hidden_size = hidden_size
        H = hidden_size
        Hp = _ceil_to(H, 128)            # lane-aligned hidden
        Vp = _ceil_to(vocab_size, 128)   # lane-aligned vocab
        # K-alignment for the input projection: single K tile if E <= 512.
        Ep = embed_size if embed_size <= 512 else _ceil_to(embed_size, 128)
        self.Hp, self.Vp, self.Ep = Hp, Vp, Ep

        k = jax.random.split(key, 7)
        s = 0.1
        emb = s * jax.random.normal(k[0], (vocab_size, embed_size), jnp.float32)
        emb = emb.at[0].set(0.0)         # nn.Embedding(padding_idx=0)

        # PyTorch layout: weight_ih (4H, E), weight_hh (4H, H), gate order i,f,g,o.
        w_ih = s * jax.random.normal(k[1], (4 * H, embed_size), jnp.float32)
        w_hh = s * jax.random.normal(k[2], (4 * H, H), jnp.float32)
        b_ih = s * jax.random.normal(k[3], (4 * H,), jnp.float32)
        b_hh = s * jax.random.normal(k[4], (4 * H,), jnp.float32)
        w_fc = s * jax.random.normal(k[5], (vocab_size, H), jnp.float32)
        b_fc = s * jax.random.normal(k[6], (vocab_size,), jnp.float32)

        # Unpadded f32 copies for the pure-JAX reference check.
        self._w_ih0, self._w_hh0 = w_ih, w_hh
        self._b0 = b_ih + b_hh
        self._w_fc0, self._b_fc0 = w_fc, b_fc

        def pad_gate_rows(w, pad_cols=0):
            # (4H, X) -> (4Hp, X + pad_cols): zero-pad each gate block H -> Hp.
            blocks = [jnp.pad(w[g * H:(g + 1) * H],
                              ((0, Hp - H), (0, pad_cols))) for g in range(4)]
            return jnp.concatenate(blocks, axis=0)

        # Embedding table pre-cast to bf16 (and K-padded if E is tiled) so the
        # gather emits the MXU-ready activation with no per-call cast/pad.
        self.embed = jnp.pad(emb, ((0, 0), (0, Ep - embed_size))).astype(jnp.bfloat16)

        w_ih_pad = jnp.pad(pad_gate_rows(w_ih), ((0, 0), (0, Ep - embed_size)))
        self.w_ih_p = w_ih_pad.T.astype(jnp.bfloat16)                       # (Ep, 4Hp)
        self.w_hh_p = pad_gate_rows(w_hh, Hp - H).T.astype(jnp.bfloat16)    # (Hp, 4Hp)
        self.b_p = pad_gate_rows((b_ih + b_hh)[:, None]).T.astype(jnp.float32)  # (1, 4Hp)
        self.w_fc_p = jnp.pad(w_fc.T, ((0, Hp - H), (0, Vp - vocab_size))
                              ).astype(jnp.bfloat16)                        # (Hp, Vp)
        self.b_fc_p = jnp.pad(b_fc, (0, Vp - vocab_size))[None, :].astype(jnp.float32)

    def __call__(self, tokens, hidden=None):
        """tokens: (B, T) int32. Returns (logits (B*T, V), (h_n, c_n))."""
        # TODO(synk): user-provided initial hidden not supported (zeros, as hidden=None).
        assert hidden is None
        B, T = tokens.shape
        H, Hp, V, Vp = self.hidden_size, self.Hp, self.vocab_size, self.Vp

        # Generation-aware batch tiling: two tiles on dual-TC v7x, one otherwise.
        if _is_dual_tensorcore():
            Bp = _ceil_to(B, 16)
            tb = Bp // 2
        else:
            Bp = _ceil_to(B, 8)
            tb = Bp

        # Embedding gather directly into time-major layout (T, B, Ep), bf16.
        x_tbe = jnp.take(self.embed, tokens.T, axis=0)              # (T, B, Ep)
        if Bp != B:
            x_tbe = jnp.pad(x_tbe, ((0, 0), (0, Bp - B), (0, 0)))

        # 1) Hoisted input projection (+ folded bias): one bf16 MXU matmul,
        #    output kept in bf16.
        gates_in = matmul_bias(x_tbe.reshape(T * Bp, self.Ep),
                               self.w_ih_p, self.b_p)               # (T*Bp, 4Hp) bf16
        gates_in = gates_in.reshape(T, Bp, 4 * Hp)

        # 2) Recurrence: only the small h @ W_hh matmul per step; bf16 output.
        out_tbh, h_last, c_last = run_lstm(gates_in, self.w_hh_p, tb)

        # 3) Output projection straight from the time-major activation (the
        #    reshape below is a free bitcast; no XLA transpose).
        y2d = out_tbh.reshape(T, Bp * Hp)
        logits3d = run_fc(y2d, Bp, self.w_fc_p, self.b_fc_p)        # (Bp, T, Vp)

        if Bp == B and Vp == V:
            logits = logits3d.reshape(B * T, V)                     # no extra copy
        else:
            logits = logits3d[:B, :, :V].reshape(B * T, V)

        h_n = h_last[:B, :H][None]                                  # (1, B, H)
        c_n = c_last[:B, :H][None]
        return logits, (h_n, c_n)

    def reference_forward(self, tokens):
        """Pure-JAX f32 reference mirroring the PyTorch module (for checking)."""
        B, T = tokens.shape
        H = self.hidden_size
        emb = self.embed[:, :self.embed_size].astype(jnp.float32)
        x = jnp.take(emb, tokens, axis=0)                           # (B, T, E)

        def step(carry, x_t):
            h, c = carry
            gates = x_t @ self._w_ih0.T + h @ self._w_hh0.T + self._b0
            i, f, g, o = jnp.split(gates, 4, axis=-1)
            c = jax.nn.sigmoid(f) * c + jax.nn.sigmoid(i) * jnp.tanh(g)
            h = jax.nn.sigmoid(o) * jnp.tanh(c)
            return (h, c), h

        h0 = jnp.zeros((B, H), jnp.float32)
        c0 = jnp.zeros((B, H), jnp.float32)
        (hN, cN), hs = lax.scan(step, (h0, c0), jnp.swapaxes(x, 0, 1))
        out = jnp.swapaxes(hs, 0, 1).reshape(-1, H)
        logits = out @ self._w_fc0.T + self._b_fc0
        return logits, (hN[None], cN[None])


if __name__ == "__main__":
    vocab_size, embed_size, hidden_size, num_layers = 64, 32, 32, 1
    B, T = 2, 8
    root = jax.random.PRNGKey(0)
    k_model, k_tok = jax.random.split(root)
    model = WordRNNPallas(vocab_size, embed_size, hidden_size, num_layers,
                          key=k_model)
    tokens = jax.random.randint(k_tok, (B, T), 0, vocab_size, dtype=jnp.int32)

    logits, (h_n, c_n) = model(tokens)
    jax.block_until_ready((logits, h_n, c_n))

    assert logits.shape == (B * T, vocab_size)
    assert h_n.shape == (1, B, hidden_size) and c_n.shape == (1, B, hidden_size)

    # Numerical check vs. pure-JAX f32 reference (tolerance covers bf16 MXU
    # operands and the bf16 gates_in / LSTM-output intermediates).
    ref_logits, (ref_h, ref_c) = model.reference_forward(tokens)
    assert float(jnp.max(jnp.abs(logits - ref_logits))) < 4e-2
    assert float(jnp.max(jnp.abs(h_n - ref_h))) < 4e-2
    assert float(jnp.max(jnp.abs(c_n - ref_c))) < 4e-2

    print("KERNEL_OK")
</pallas_src>

<mosaic_0001>
module attributes {stable_mosaic.version = 11 : i64} {
  func.func @_matmul_bias_kernel_1k(%arg0: i32, %arg1: i32, %arg2: memref<64x32xbf16, #tpu.memory_space<vmem>>, %arg3: memref<32x512xbf16, #tpu.memory_space<vmem>>, %arg4: memref<1x512xf32, #tpu.memory_space<vmem>>, %arg5: memref<64x512xbf16, #tpu.memory_space<vmem>>) attributes {dimension_semantics = [#tpu.dimension_semantics<parallel>, #tpu.dimension_semantics<parallel>], iteration_bounds = array<i64: 1, 1>, scalar_prefetch = 0 : i64, scratch_operands = 0 : i64, tpu.core_type = #tpu.core_type<tc>, window_params = [{transform_indices = @transform_0, window_bounds = array<i64: 64, 32>}, {transform_indices = @transform_1, window_bounds = array<i64: 32, 512>}, {transform_indices = @transform_2, window_bounds = array<i64: 1, 512>}, {transform_indices = @transform_3, window_bounds = array<i64: 64, 512>}]} {
    %c0 = arith.constant 0 : index
    %c0_0 = arith.constant 0 : index
    %0 = vector.load %arg2[%c0, %c0_0] : memref<64x32xbf16, #tpu.memory_space<vmem>>, vector<64x32xbf16>
    %c0_1 = arith.constant 0 : index
    %c0_2 = arith.constant 0 : index
    %1 = vector.load %arg3[%c0_1, %c0_2] : memref<32x512xbf16, #tpu.memory_space<vmem>>, vector<32x512xbf16>
    %cst = arith.constant dense<0.000000e+00> : vector<64x512xf32>
    %2 = tpu.matmul %0, %1, %cst {dimension_numbers = #tpu.dot_dimension_numbers<[1], [0], [0], [1], [0, 0, 1, 1], [], []>} : vector<64x32xbf16>, vector<32x512xbf16>, vector<64x512xf32> -> vector<64x512xf32>
    %c0_3 = arith.constant 0 : index
    %c0_4 = arith.constant 0 : index
    %3 = vector.load %arg4[%c0_3, %c0_4] : memref<1x512xf32, #tpu.memory_space<vmem>>, vector<1x512xf32>
    %4 = vector.broadcast %3 : vector<1x512xf32> to vector<64x512xf32>
    %5 = arith.addf %2, %4 : vector<64x512xf32>
    %6 = arith.truncf %5 : vector<64x512xf32> to vector<64x512xbf16>
    %c0_5 = arith.constant 0 : index
    %c0_6 = arith.constant 0 : index
    %7 = vector.load %arg5[%c0_5, %c0_6] : memref<64x512xbf16, #tpu.memory_space<vmem>>, vector<64x512xbf16>
    tpu.vector_store %arg5[%c0_5, %c0_6], %6 {strides = array<i32>} : memref<64x512xbf16, #tpu.memory_space<vmem>>, vector<64x512xbf16>,
    return
  }
  func.func @transform_0(%arg0: i32, %arg1: i32) -> (i32, i32) {
    %c0_i32 = arith.constant 0 : i32
    %c0_i32_0 = arith.constant 0 : i32
    return %arg0, %c0_i32 : i32, i32
  }
  func.func @transform_1(%arg0: i32, %arg1: i32) -> (i32, i32) {
    %c0_i32 = arith.constant 0 : i32
    %c0_i32_0 = arith.constant 0 : i32
    return %c0_i32, %arg1 : i32, i32
  }
  func.func @transform_2(%arg0: i32, %arg1: i32) -> (i32, i32) {
    %c0_i32 = arith.constant 0 : i32
    %c0_i32_0 = arith.constant 0 : i32
    return %c0_i32, %arg1 : i32, i32
  }
  func.func @transform_3(%arg0: i32, %arg1: i32) -> (i32, i32) {
    %c0_i32 = arith.constant 0 : i32
    return %arg0, %arg1 : i32, i32
  }
}

</mosaic_0001>

<llo_original>
// kernel: tpu_custom_call.1
$region0: #{tpu_custom_call.1}
  #allocation0 [shape = 'u32[]', space=smem, size = 0x4, offset = 0x4, fixed_abs, tag = 'smem constant byte address 0x4 - core index']
  #allocation1 [shape = 'u32[72,128]{1,0:T(1,128)}', space=vmem, size = 0x9000, scoped, tag = 'internal scratch']
  %s0 = inlined_call_operand.vmem [shape: bf16[64,32], index: 0, kind: input, shape index: {}]
  %s1 = inlined_call_operand.hbm [shape: bf16[32,512], index: 1, kind: input, shape index: {}]
  %s2 = inlined_call_operand.vmem [shape: f32[1,512], index: 2, kind: input, shape index: {}]
  %s3 = inlined_call_operand.hbm [shape: bf16[64,512], index: 3, kind: output, shape index: {}]
  %s4 = sld [smem:[#allocation0]]
  $region26: #{tpu_custom_call.1} parent=0
    _
  %s6 = ssub.s32 1, %s4
  %s7 = scalar_select 0, %s6, %s4
  $region1: #{tpu_custom_call.1} parent=0
    #allocation2 [shape = 'u8[32768]{0}', space=vmem, size = 0x8000, scoped, tag = 'input window, operand 1, single buffered']
    #allocation3 [shape = 's32[1]{0}', space=sflag, size = 0x4, scoped, tag = 'scoped memory for tpu_custom_call.1']
    #allocation4 [shape = 's32[1]{0}', space=sflag, size = 0x4, scoped, tag = 'scoped memory for tpu_custom_call.1']
    #allocation5 [shape = 'u8[65536]{0}', space=vmem, size = 0x10000, scoped, tag = 'output window, operand 0, single buffered']
    %8 = vsyncpa [#allocation3], 0
    %9 = vsyncpa [#allocation4], 0
    // Predicated region
    $region2: #{tpu_custom_call.1} parent=1 // pred_check
      _
    $region3: #{tpu_custom_call.1} parent=1 // pred_check_branch
      %11 = sbr.rel (0) target = $region5
    $region4: #{tpu_custom_call.1} parent=1 // pred_region
      _
    $region5: #{tpu_custom_call.1} parent=1 // pred_fallthru
      _
    // Predicated region
    $region6: #{tpu_custom_call.1} parent=1 // pred_check
      _
    $region7: #{tpu_custom_call.1} parent=1 // pred_check_branch
      %13 = sbr.rel (0) target = $region9
    $region8: #{tpu_custom_call.1} parent=1 // pred_region
      %15 = vsyncadd [#allocation3], 0
      %s16 = sshll.u32 %s1, 4
      %s17 = int_to_ptr.hbm [resolvable:$true] %s16
      %s18 = sshll.u32 [#allocation2], 4
      %s19 = int_to_ptr.vmem [resolvable:$true] %s18
      %24 = dma.hbm_to_vmem [thread:$0]  %s17, 1024, %s19, [#allocation3], 256, 256, 16
    $region9: #{tpu_custom_call.1} parent=1 // pred_fallthru
      _
    // Predicated region
    $region10: #{tpu_custom_call.1} parent=1 // pred_check
      _
    $region11: #{tpu_custom_call.1} parent=1 // pred_check_branch
      %26 = sbr.rel (0) target = $region13
    $region12: #{tpu_custom_call.1} parent=1 // pred_region
      _
    $region13: #{tpu_custom_call.1} parent=1 // pred_fallthru
      _
    // Predicated region
    $region14: #{tpu_custom_call.1} parent=1 // pred_check
      _
    $region15: #{tpu_custom_call.1} parent=1 // pred_check_branch
      %28 = sbr.rel (0) target = $region17
    $region16: #{tpu_custom_call.1} parent=1 // pred_region
      %30 = dma.done [#allocation3], 1024
    $region17: #{tpu_custom_call.1} parent=1 // pred_fallthru
      _
    %v32 = vld [vmem:[%s0] sm:$0xf]
    %v33 = vld [vmem:[%s0 + $0x4] sm:$0xf]
    %v34 = vld [vmem:[%s0 + $0x8] sm:$0xf]
    %v35 = vld [vmem:[%s0 + $0xc] sm:$0xf]
    %v36 = vld [vmem:[%s0 + $0x10] sm:$0xf]
    %v37 = vld [vmem:[%s0 + $0x14] sm:$0xf]
    %v38 = vld [vmem:[%s0 + $0x18] sm:$0xf]
    %v39 = vld [vmem:[%s0 + $0x1c] sm:$0xf]
    %v40 = vld [vmem:[#allocation2] sm:$0xff]
    %v41 = vld [vmem:[#allocation2 + $0x8] sm:$0xff]
    %v42 = vld [vmem:[#allocation2 + $0x10] sm:$0xff]
    %v43 = vld [vmem:[#allocation2 + $0x18] sm:$0xff]
    %v44 = vld [vmem:[#allocation2 + $0x20] sm:$0xff]
    %v45 = vld [vmem:[#allocation2 + $0x28] sm:$0xff]
    %v46 = vld [vmem:[#allocation2 + $0x30] sm:$0xff]
    %v47 = vld [vmem:[#allocation2 + $0x38] sm:$0xff]
    %v48 = vld [vmem:[%s2] sm:$0xf]
    %v50 = vperm.slane %v48, 0
    %v51 = vperm.slane %v48, 1
    %v52 = vperm.slane %v48, 2
    %v53 = vperm.slane %v48, 3
    %v66 = vunpack.c.l.b16 %v32
    %v67 = vunpack.c.l.b16 %v33
    %v68 = vunpack.c.l.b16 %v34
    %v69 = vunpack.c.l.b16 %v35
    %v70 = vunpack.c.l.b16 %v36
    %v71 = vunpack.c.l.b16 %v37
    %v72 = vunpack.c.l.b16 %v38
    %v73 = vunpack.c.l.b16 %v39
    %v74 = vpack.c.b16 %v67, %v66
    %v75 = vpack.c.b16 %v69, %v68
    %v76 = vpack.c.b16 %v71, %v70
    %v77 = vpack.c.b16 %v73, %v72
    %v86 = vunpack.c.l.b16 %v40
    %v87 = vunpack.c.h.b16 %v40
    %v88 = vunpack.c.l.b16 %v41
    %v89 = vunpack.c.h.b16 %v41
    %v90 = vunpack.c.l.b16 %v42
    %v91 = vunpack.c.h.b16 %v42
    %v92 = vunpack.c.l.b16 %v43
    %v93 = vunpack.c.h.b16 %v43
    %v94 = vunpack.c.l.b16 %v44
    %v95 = vunpack.c.h.b16 %v44
    %v96 = vunpack.c.l.b16 %v45
    %v97 = vunpack.c.h.b16 %v45
    %v98 = vunpack.c.l.b16 %v46
    %v99 = vunpack.c.h.b16 %v46
    %v100 = vunpack.c.l.b16 %v47
    %v101 = vunpack.c.h.b16 %v47
    %v102 = vpack.c.b16 %v90, %v86
    %v103 = vpack.c.b16 %v91, %v87
    %v104 = vpack.c.b16 %v92, %v88
    %v105 = vpack.c.b16 %v93, %v89
    %v106 = vpack.c.b16 %v98, %v94
    %v107 = vpack.c.b16 %v99, %v95
    %v108 = vpack.c.b16 %v100, %v96
    %v109 = vpack.c.b16 %v101, %v97
    %vm118 = vcmask 261120
    %v120 = vsel %vm118, %v74, 0
    %v123 = vsel %vm118, %v75, 0
    %v126 = vsel %vm118, %v76, 0
    %v129 = vsel %vm118, %v77, 0
    %131 = vmatpush.bf16.msra.mxu0 0
    %132 = vmatpush.bf16.msra.mxu0 0
    %133 = vmatpush.bf16.msra.mxu0 0
    %134 = vmatpush.bf16.msra.mxu0 0
    %135 = vmatpush.bf16.msra.mxu0 0
    %136 = vmatpush.bf16.msra.mxu0 0
    %137 = vmatpush.bf16.msra.mxu0 %v106
    %138 = vmatpush.bf16.msra.mxu0 %v102
    %139 = vmatmul.bf16.gmra.mxu0 %v120
    %v140 = vpop.f32.mrf.mxu0
    %v141 = vadd.f32 %v50, %v140
    %v142 = vpop.f32.mrf.mxu0
    %v143 = vadd.f32 %v50, %v142
    %144 = vmatmul.bf16.gmra.mxu0 %v123
    %v145 = vpop.f32.mrf.mxu0
    %v146 = vadd.f32 %v50, %v145
    %v147 = vpop.f32.mrf.mxu0
    %v148 = vadd.f32 %v50, %v147
    %149 = vmatmul.bf16.gmra.mxu0 %v126
    %v150 = vpop.f32.mrf.mxu0
    %v151 = vadd.f32 %v50, %v150
    %v152 = vpop.f32.mrf.mxu0
    %v153 = vadd.f32 %v50, %v152
    %154 = vmatmul.bf16.gmra.mxu0 %v129
    %v155 = vpop.f32.mrf.mxu0
    %v156 = vadd.f32 %v50, %v155
    %v157 = vpop.f32.mrf.mxu0
    %v158 = vadd.f32 %v50, %v157
    %159 = vdwg.mxu0
    %160 = vmatpush.bf16.msra.mxu0 0
    %161 = vmatpush.bf16.msra.mxu0 0
    %162 = vmatpush.bf16.msra.mxu0 0
    %163 = vmatpush.bf16.msra.mxu0 0
    %164 = vmatpush.bf16.msra.mxu0 0
    %165 = vmatpush.bf16.msra.mxu0 0
    %166 = vmatpush.bf16.msra.mxu0 %v107
    %167 = vmatpush.bf16.msra.mxu0 %v103
    %168 = vmatmul.bf16.gmra.mxu0 %v120
    %v169 = vpop.f32.mrf.mxu0
    %v170 = vadd.f32 %v51, %v169
    %v171 = vpop.f32.mrf.mxu0
    %v172 = vadd.f32 %v51, %v171
    %173 = vmatmul.bf16.gmra.mxu0 %v123
    %v174 = vpop.f32.mrf.mxu0
    %v175 = vadd.f32 %v51, %v174
    %v176 = vpop.f32.mrf.mxu0
    %v177 = vadd.f32 %v51, %v176
    %178 = vmatmul.bf16.gmra.mxu0 %v126
    %v179 = vpop.f32.mrf.mxu0
    %v180 = vadd.f32 %v51, %v179
    %v181 = vpop.f32.mrf.mxu0
    %v182 = vadd.f32 %v51, %v181
    %183 = vmatmul.bf16.gmra.mxu0 %v129
    %v184 = vpop.f32.mrf.mxu0
    %v185 = vadd.f32 %v51, %v184
    %v186 = vpop.f32.mrf.mxu0
    %v187 = vadd.f32 %v51, %v186
    %188 = vdwg.mxu0
    %189 = vmatpush.bf16.msra.mxu0 0
    %190 = vmatpush.bf16.msra.mxu0 0
    %191 = vmatpush.bf16.msra.mxu0 0
    %192 = vmatpush.bf16.msra.mxu0 0
    %193 = vmatpush.bf16.msra.mxu0 0
    %194 = vmatpush.bf16.msra.mxu0 0
    %195 = vmatpush.bf16.msra.mxu0 %v108
    %196 = vmatpush.bf16.msra.mxu0 %v104
    %197 = vmatmul.bf16.gmra.mxu0 %v120
    %v198 = vpop.f32.mrf.mxu0
    %v199 = vadd.f32 %v52, %v198
    %v200 = vpop.f32.mrf.mxu0
    %v201 = vadd.f32 %v52, %v200
    %202 = vmatmul.bf16.gmra.mxu0 %v123
    %v203 = vpop.f32.mrf.mxu0
    %v204 = vadd.f32 %v52, %v203
    %v205 = vpop.f32.mrf.mxu0
    %v206 = vadd.f32 %v52, %v205
    %207 = vmatmul.bf16.gmra.mxu0 %v126
    %v208 = vpop.f32.mrf.mxu0
    %v209 = vadd.f32 %v52, %v208
    %v210 = vpop.f32.mrf.mxu0
    %v211 = vadd.f32 %v52, %v210
    %212 = vmatmul.bf16.gmra.mxu0 %v129
    %v213 = vpop.f32.mrf.mxu0
    %v214 = vadd.f32 %v52, %v213
    %v215 = vpop.f32.mrf.mxu0
    %v216 = vadd.f32 %v52, %v215
    %217 = vdwg.mxu0
    %218 = vmatpush.bf16.msra.mxu0 0
    %219 = vmatpush.bf16.msra.mxu0 0
    %220 = vmatpush.bf16.msra.mxu0 0
    %221 = vmatpush.bf16.msra.mxu0 0
    %222 = vmatpush.bf16.msra.mxu0 0
    %223 = vmatpush.bf16.msra.mxu0 0
    %224 = vmatpush.bf16.msra.mxu0 %v109
    %225 = vmatpush.bf16.msra.mxu0 %v105
    %226 = vmatmul.bf16.gmra.mxu0 %v120
    %v227 = vpop.f32.mrf.mxu0
    %v228 = vadd.f32 %v53, %v227
    %v229 = vpop.f32.mrf.mxu0
    %v230 = vadd.f32 %v53, %v229
    %231 = vmatmul.bf16.gmra.mxu0 %v123
    %v232 = vpop.f32.mrf.mxu0
    %v233 = vadd.f32 %v53, %v232
    %v234 = vpop.f32.mrf.mxu0
    %v235 = vadd.f32 %v53, %v234
    %236 = vmatmul.bf16.gmra.mxu0 %v126
    %v237 = vpop.f32.mrf.mxu0
    %v238 = vadd.f32 %v53, %v237
    %v239 = vpop.f32.mrf.mxu0
    %v240 = vadd.f32 %v53, %v239
    %241 = vmatmul.bf16.gmra.mxu0 %v129
    %v242 = vpop.f32.mrf.mxu0
    %v243 = vadd.f32 %v53, %v242
    %v244 = vpop.f32.mrf.mxu0
    %v245 = vadd.f32 %v53, %v244
    %246 = vdwg.mxu0
    %v247 = vpack.c.bf16 %v170, %v141
    %v248 = vpack.c.bf16 %v228, %v199
    %v249 = vpack.c.bf16 %v172, %v143
    %v250 = vpack.c.bf16 %v230, %v201
    %v251 = vpack.c.bf16 %v175, %v146
    %v252 = vpack.c.bf16 %v233, %v204
    %v253 = vpack.c.bf16 %v177, %v148
    %v254 = vpack.c.bf16 %v235, %v206
    %v255 = vpack.c.bf16 %v180, %v151
    %v256 = vpack.c.bf16 %v238, %v209
    %v257 = vpack.c.bf16 %v182, %v153
    %v258 = vpack.c.bf16 %v240, %v211
    %v259 = vpack.c.bf16 %v185, %v156
    %v260 = vpack.c.bf16 %v243, %v214
    %v261 = vpack.c.bf16 %v187, %v158
    %v262 = vpack.c.bf16 %v245, %v216
    %263 = vst [vmem:[#allocation5] sm:$0xff] %v247
    %264 = vst [vmem:[#allocation5 + $0x8] sm:$0xff] %v248
    %265 = vst [vmem:[#allocation5 + $0x10] sm:$0xff] %v249
    %266 = vst [vmem:[#allocation5 + $0x18] sm:$0xff] %v250
    %267 = vst [vmem:[#allocation5 + $0x20] sm:$0xff] %v251
    %268 = vst [vmem:[#allocation5 + $0x28] sm:$0xff] %v252
    %269 = vst [vmem:[#allocation5 + $0x30] sm:$0xff] %v253
    %270 = vst [vmem:[#allocation5 + $0x38] sm:$0xff] %v254
    %271 = vst [vmem:[#allocation5 + $0x40] sm:$0xff] %v255
    %272 = vst [vmem:[#allocation5 + $0x48] sm:$0xff] %v256
    %273 = vst [vmem:[#allocation5 + $0x50] sm:$0xff] %v257
    %274 = vst [vmem:[#allocation5 + $0x58] sm:$0xff] %v258
    %275 = vst [vmem:[#allocation5 + $0x60] sm:$0xff] %v259
    %276 = vst [vmem:[#allocation5 + $0x68] sm:$0xff] %v260
    %277 = vst [vmem:[#allocation5 + $0x70] sm:$0xff] %v261
    %278 = vst [vmem:[#allocation5 + $0x78] sm:$0xff] %v262
    // Predicated region
    $region18: #{tpu_custom_call.1} parent=1 // pred_check
      _
    $region19: #{tpu_custom_call.1} parent=1 // pred_check_branch
      %280 = sbr.rel (0) target = $region21
    $region20: #{tpu_custom_call.1} parent=1 // pred_region
      %282 = vsyncadd [#allocation4], 0
      %s283 = sshll.u32 [#allocation5], 4
      %s284 = int_to_ptr.vmem [resolvable:$true] %s283
      %s285 = sshll.u32 %s3, 4
      %s286 = int_to_ptr.hbm [resolvable:$true] %s285
      %291 = dma.vmem_to_hbm [thread:$0]  %s284, 2048, %s286, [#allocation4], 256, 256, 16
    $region21: #{tpu_custom_call.1} parent=1 // pred_fallthru
      _
    // Predicated region
    $region22: #{tpu_custom_call.1} parent=1 // pred_check
      _
    $region23: #{tpu_custom_call.1} parent=1 // pred_check_branch
      %293 = sbr.rel (0) target = $region25
    $region24: #{tpu_custom_call.1} parent=1 // pred_region
      %295 = dma.done [#allocation4], 2048
    $region25: #{tpu_custom_call.1} parent=1 // pred_fallthru
      _
    %296 = vsyncpa [#allocation3], 1
    %297 = vsyncpa [#allocation4], 1

</llo_original>
